<compile_context>
chip_gen: v6e
topology: v6e:2x2x1
jax: 0.10.0
libtpu: 0.0.40
codegen_flags: <defaults>
</compile_context>

<pallas_src>
import math

import jax
import jax.numpy as jnp
from jax import lax
from jax.experimental import pallas as pl
from jax.experimental.pallas import tpu as pltpu


# ------------------------------ Pallas kernels -------------------------------

def _linear_kernel(x_ref, w_ref, b_ref, o_ref):
    # x: (bm, K), w: (K, N), b: (1, N) -> o: (bm, N)  (MXU matmul + bias)
    o_ref[...] = (
        jnp.dot(x_ref[...], w_ref[...], preferred_element_type=jnp.float32)
        + b_ref[...]
    )


def _pick_block_rows(m):
    for bm in (512, 256, 128):
        if m % bm == 0:
            return bm
    return m


def linear(x2d, w, b):
    """Row-tiled (M, K) @ (K, N) + (N,) with double-buffered pipelining."""
    M, K = x2d.shape
    N = w.shape[1]
    bm = _pick_block_rows(M)
    # TODO(synk): on v6e/v7x cast activations/weights to bfloat16 (f32 accum)
    # for ~2x MXU throughput; kept f32 to match the f32 reference closely.
    return pl.pallas_call(
        _linear_kernel,
        out_shape=jax.ShapeDtypeStruct((M, N), jnp.float32),
        grid=(M // bm,),
        in_specs=[
            pl.BlockSpec((bm, K), lambda i: (i, 0)),
            pl.BlockSpec((K, N), lambda i: (0, 0)),
            pl.BlockSpec((1, N), lambda i: (0, 0)),
        ],
        out_specs=pl.BlockSpec((bm, N), lambda i: (i, 0)),
        compiler_params=pltpu.CompilerParams(dimension_semantics=("parallel",)),
    )(x2d, w, b.reshape(1, N))


def _corr_gram_kernel(q_ref, k_ref, g_ref):
    # q_ref, k_ref: (1, T, C) -> G[t1, t2] = sum_c q[t1, c] * k[t2, c]
    # dot_general contracting the lane axis C of both operands (no explicit .T).
    g_ref[0] = lax.dot_general(
        q_ref[0], k_ref[0],
        dimension_numbers=(((1,), (1,)), ((), ())),
        preferred_element_type=jnp.float32,
    )


def corr_gram(q_btc, k_btc):
    B, T, C = q_btc.shape
    return pl.pallas_call(
        _corr_gram_kernel,
        out_shape=jax.ShapeDtypeStruct((B, T, T), jnp.float32),
        grid=(B,),
        in_specs=[
            pl.BlockSpec((1, T, C), lambda b: (b, 0, 0)),
            pl.BlockSpec((1, T, C), lambda b: (b, 0, 0)),
        ],
        out_specs=pl.BlockSpec((1, T, T), lambda b: (b, 0, 0)),
        compiler_params=pltpu.CompilerParams(dimension_semantics=("parallel",)),
    )(q_btc, k_btc)


def _mix_kernel(w_ref, v_ref, o_ref):
    # w_ref: (1, T, T) per-batch delay-mixing matrix, v_ref: (1, T, C)
    # agg[t, c] = sum_s W[t, s] * v[s, c]  (single MXU matmul)
    o_ref[0] = jnp.dot(w_ref[0], v_ref[0], preferred_element_type=jnp.float32)


def delay_mix(mix_w, v_btc):
    B, T, C = v_btc.shape
    return pl.pallas_call(
        _mix_kernel,
        out_shape=jax.ShapeDtypeStruct((B, T, C), jnp.float32),
        grid=(B,),
        in_specs=[
            pl.BlockSpec((1, T, T), lambda b: (b, 0, 0)),
            pl.BlockSpec((1, T, C), lambda b: (b, 0, 0)),
        ],
        out_specs=pl.BlockSpec((1, T, C), lambda b: (b, 0, 0)),
        compiler_params=pltpu.CompilerParams(dimension_semantics=("parallel",)),
    )(mix_w, v_btc)


# -------------------------- forward (glue + kernels) --------------------------

def autocorrelation_forward(x, params, n_head, factor=5):
    B, T, C = x.shape
    H = n_head
    E = C // H

    # Fused Q|K|V projection: one tiled MXU matmul over (B*T, C) x (C, 3C).
    wqkv = jnp.concatenate([params["wq"], params["wk"], params["wv"]], axis=1)
    bqkv = jnp.concatenate([params["bq"], params["bk"], params["bv"]], axis=0)
    qkv = linear(x.reshape(B * T, C), wqkv, bqkv).reshape(B, T, 3 * C)
    q, k, v = qkv[..., :C], qkv[..., C:2 * C], qkv[..., 2 * C:]

    # (1) period-based dependencies.
    # Gram matrix on the MXU, then
    #   mean_value[b, tau] = (1/C) * sum_t G[b, t, (t - tau) % T]
    # (== mean over heads/channels of irfft(rfft(q) * conj(rfft(k)))).
    G = corr_gram(q, k)                                    # (B, T, T)
    t_idx = jnp.arange(T)
    diag_idx = (t_idx[:, None] - t_idx[None, :]) % T       # idx[t, tau] = (t - tau) % T
    mean_value = jnp.take_along_axis(
        G, jnp.broadcast_to(diag_idx[None], (B, T, T)), axis=2
    ).sum(axis=1) / C                                      # (B, T)

    # top-k delay selection + softmax (tiny data-dependent step, XLA glue).
    top_k = int(factor * math.log(T))
    weights, delay = lax.top_k(mean_value, top_k)          # (B, top_k)
    tmp_corr = jax.nn.softmax(weights, axis=-1)            # (B, top_k)

    # (2) time-delay aggregation.  Fold the top_k delays + softmax weights into
    # a per-batch (T, T) mixing matrix (tiny XLA glue), then one MXU matmul per
    # batch in Pallas:
    #   mix_w[b, t, s] = sum_i tmp_corr[b, i] * [s == (t + delay[b, i]) % T]
    #   agg[b, t, c]   = sum_s mix_w[b, t, s] * v[b, s, c]
    shifted = (t_idx[None, None, :] + delay[:, :, None]) % T            # (B, K, T)
    mix_w = jnp.einsum(
        "bk,bkts->bts", tmp_corr, jax.nn.one_hot(shifted, T, dtype=jnp.float32)
    )                                                                    # (B, T, T)
    agg = delay_mix(mix_w, v)                                            # (B, T, C)

    # Reproduce torch exactly: delays_agg (B,H,E,T) -> permute(0,3,1,2)
    # -> transpose(1,2).contiguous().view(B,T,C)  (intentional head/time mixing).
    V = jnp.transpose(agg.reshape(B, T, H, E), (0, 2, 1, 3)).reshape(B, T, C)

    out = linear(V.reshape(B * T, C), params["wp"], params["bp"]).reshape(B, T, C)
    # attn_drop / resid_drop: identity (eval mode, retrain=False).
    return out


# --------------------------- pure-JAX FFT reference ---------------------------

def reference_forward(x, params, n_head, factor=5):
    B, T, C = x.shape
    H = n_head
    E = C // H

    def lin(y, w, b):
        return y @ w + b

    q = lin(x, params["wq"], params["bq"]).reshape(B, T, H, E)
    k = lin(x, params["wk"], params["bk"]).reshape(B, T, H, E)
    v = lin(x, params["wv"], params["bv"]).reshape(B, T, H, E)

    qh = jnp.transpose(q, (0, 2, 3, 1))  # (B,H,E,T)
    kh = jnp.transpose(k, (0, 2, 3, 1))
    vh = jnp.transpose(v, (0, 2, 3, 1))

    q_fft = jnp.fft.rfft(qh, axis=-1)
    k_fft = jnp.fft.rfft(kh, axis=-1)
    corr = jnp.fft.irfft(q_fft * jnp.conj(k_fft), n=T, axis=-1)

    mean_value = corr.mean(axis=(1, 2))                    # (B, T)
    top_k = int(factor * math.log(T))
    weights, delay = lax.top_k(mean_value, top_k)
    tmp_corr = jax.nn.softmax(weights, axis=-1)

    vals2 = jnp.concatenate([vh, vh], axis=-1)
    init_index = jnp.arange(T)[None, None, None, :]
    agg = jnp.zeros_like(vh)
    for i in range(top_k):
        idx = jnp.broadcast_to(
            init_index + delay[:, i][:, None, None, None], (B, H, E, T)
        )
        pattern = jnp.take_along_axis(vals2, idx, axis=-1)
        agg = agg + pattern * tmp_corr[:, i][:, None, None, None]

    V = jnp.transpose(agg, (0, 1, 3, 2)).reshape(B, T, C)
    return lin(V, params["wp"], params["bp"])


# ------------------------------------ demo ------------------------------------

if __name__ == "__main__":
    B, T, C, H = 2, 16, 32, 4
    key = jax.random.PRNGKey(0)
    ks = jax.random.split(key, 9)
    params = {
        "wq": 0.05 * jax.random.normal(ks[0], (C, C), jnp.float32),
        "bq": 0.01 * jax.random.normal(ks[1], (C,), jnp.float32),
        "wk": 0.05 * jax.random.normal(ks[2], (C, C), jnp.float32),
        "bk": 0.01 * jax.random.normal(ks[3], (C,), jnp.float32),
        "wv": 0.05 * jax.random.normal(ks[4], (C, C), jnp.float32),
        "bv": 0.01 * jax.random.normal(ks[5], (C,), jnp.float32),
        "wp": 0.05 * jax.random.normal(ks[6], (C, C), jnp.float32),
        "bp": 0.01 * jax.random.normal(ks[7], (C,), jnp.float32),
    }
    x = jax.random.normal(ks[8], (B, T, C), jnp.float32)

    out = jax.block_until_ready(autocorrelation_forward(x, params, H))
    assert out.shape == (B, T, C)

    ref = reference_forward(x, params, H)
    if not jnp.allclose(out, ref, rtol=2e-3, atol=2e-3):
        raise AssertionError("Pallas result does not match FFT-based reference")

    print("KERNEL_OK")
</pallas_src>

<mosaic_0001>
module attributes {stable_mosaic.version = 11 : i64} {
  func.func @_linear_kernel(%arg0: i32, %arg1: memref<32x32xf32, #tpu.memory_space<vmem>>, %arg2: memref<32x96xf32, #tpu.memory_space<vmem>>, %arg3: memref<1x96xf32, #tpu.memory_space<vmem>>, %arg4: memref<32x96xf32, #tpu.memory_space<vmem>>) attributes {dimension_semantics = [#tpu.dimension_semantics<parallel>], iteration_bounds = array<i64: 1>, scalar_prefetch = 0 : i64, scratch_operands = 0 : i64, tpu.core_type = #tpu.core_type<tc>, window_params = [{transform_indices = @transform_0, window_bounds = array<i64: 32, 32>}, {pipeline_mode = #tpu.pipeline_mode<synchronous>, transform_indices = @transform_1, window_bounds = array<i64: 32, 96>}, {pipeline_mode = #tpu.pipeline_mode<synchronous>, transform_indices = @transform_2, window_bounds = array<i64: 1, 96>}, {transform_indices = @transform_3, window_bounds = array<i64: 32, 96>}]} {
    %c0 = arith.constant 0 : index
    %c0_0 = arith.constant 0 : index
    %0 = vector.load %arg1[%c0, %c0_0] : memref<32x32xf32, #tpu.memory_space<vmem>>, vector<32x32xf32>
    %c0_1 = arith.constant 0 : index
    %c0_2 = arith.constant 0 : index
    %1 = vector.load %arg2[%c0_1, %c0_2] : memref<32x96xf32, #tpu.memory_space<vmem>>, vector<32x96xf32>
    %cst = arith.constant dense<0.000000e+00> : vector<32x96xf32>
    %2 = tpu.matmul %0, %1, %cst {dimension_numbers = #tpu.dot_dimension_numbers<[1], [0], [0], [1], [0, 0, 1, 1], [], []>} : vector<32x32xf32>, vector<32x96xf32>, vector<32x96xf32> -> vector<32x96xf32>
    %c0_3 = arith.constant 0 : index
    %c0_4 = arith.constant 0 : index
    %3 = vector.load %arg3[%c0_3, %c0_4] : memref<1x96xf32, #tpu.memory_space<vmem>>, vector<1x96xf32>
    %4 = vector.broadcast %3 : vector<1x96xf32> to vector<32x96xf32>
    %5 = arith.addf %2, %4 : vector<32x96xf32>
    %c0_5 = arith.constant 0 : index
    %c0_6 = arith.constant 0 : index
    %6 = vector.load %arg4[%c0_5, %c0_6] : memref<32x96xf32, #tpu.memory_space<vmem>>, vector<32x96xf32>
    tpu.vector_store %arg4[%c0_5, %c0_6], %5 {strides = array<i32>} : memref<32x96xf32, #tpu.memory_space<vmem>>, vector<32x96xf32>,
    return
  }
  func.func @transform_0(%arg0: i32) -> (i32, i32) {
    %c0_i32 = arith.constant 0 : i32
    %c0_i32_0 = arith.constant 0 : i32
    return %arg0, %c0_i32 : i32, i32
  }
  func.func @transform_1(%arg0: i32) -> (i32, i32) {
    %c0_i32 = arith.constant 0 : i32
    %c0_i32_0 = arith.constant 0 : i32
    %c0_i32_1 = arith.constant 0 : i32
    return %c0_i32, %c0_i32_0 : i32, i32
  }
  func.func @transform_2(%arg0: i32) -> (i32, i32) {
    %c0_i32 = arith.constant 0 : i32
    %c0_i32_0 = arith.constant 0 : i32
    %c0_i32_1 = arith.constant 0 : i32
    return %c0_i32, %c0_i32_0 : i32, i32
  }
  func.func @transform_3(%arg0: i32) -> (i32, i32) {
    %c0_i32 = arith.constant 0 : i32
    %c0_i32_0 = arith.constant 0 : i32
    return %arg0, %c0_i32 : i32, i32
  }
}

</mosaic_0001>

<llo_original>
// kernel: tpu_custom_call.1
$region0: #{tpu_custom_call.1}
  #allocation0 [shape = 'u32[]', space=smem, size = 0x4, offset = 0x4, fixed_abs, tag = 'smem constant byte address 0x4 - core index']
  #allocation1 [shape = 'u32[144,128]{1,0:T(1,128)}', space=vmem, size = 0x12000, scoped, tag = 'internal scratch']
  %s0 = inlined_call_operand.hbm [shape: f32[32,32], index: 0, kind: input, shape index: {}]
  %s1 = inlined_call_operand.hbm [shape: f32[32,96], index: 1, kind: input, shape index: {}]
  %s2 = inlined_call_operand.vmem [shape: f32[1,96], index: 2, kind: input, shape index: {}]
  %s3 = inlined_call_operand.hbm [shape: f32[32,96], index: 3, kind: output, shape index: {}]
  %s4 = sld [smem:[#allocation0]]
  $region30: #{tpu_custom_call.1} parent=0
    _
  %s6 = ssub.s32 1, %s4
  %s7 = scalar_select 0, %s6, %s4
  $region1: #{tpu_custom_call.1} parent=0
    #allocation2 [shape = 'u8[16384]{0}', space=vmem, size = 0x4000, scoped, tag = 'input window, operand 0, single buffered']
    #allocation3 [shape = 's32[1]{0}', space=sflag, size = 0x4, scoped, tag = 'scoped memory for tpu_custom_call.1']
    #allocation4 [shape = 's32[1]{0}', space=sflag, size = 0x4, scoped, tag = 'scoped memory for tpu_custom_call.1']
    #allocation5 [shape = 'u8[16384]{0}', space=vmem, size = 0x4000, scoped, tag = 'input window, operand 1, single buffered']
    #allocation6 [shape = 's32[1]{0}', space=sflag, size = 0x4, scoped, tag = 'scoped memory for tpu_custom_call.1']
    #allocation7 [shape = 'u8[16384]{0}', space=vmem, size = 0x4000, scoped, tag = 'output window, operand 0, single buffered']
    %8 = vsyncpa [#allocation3], 0
    %9 = vsyncpa [#allocation6], 0
    %10 = vsyncpa [#allocation4], 0
    // Predicated region
    $region2: #{tpu_custom_call.1} parent=1 // pred_check
      _
    $region3: #{tpu_custom_call.1} parent=1 // pred_check_branch
      %12 = sbr.rel (0) target = $region5
    $region4: #{tpu_custom_call.1} parent=1 // pred_region
      %s14 = ssub.s32 512, 512
      %15 = vsyncadd [#allocation3], %s14
      %s16 = sshll.u32 [#allocation2], 4
      %s17 = int_to_ptr.vmem [resolvable:$true] %s16
      %22 = dma.hbm_to_vmem [thread:$0]  %s0, 512, %s17, [#allocation3], 128, 128, 8
    $region5: #{tpu_custom_call.1} parent=1 // pred_fallthru
      _
    // Predicated region
    $region6: #{tpu_custom_call.1} parent=1 // pred_check
      _
    $region7: #{tpu_custom_call.1} parent=1 // pred_check_branch
      %24 = sbr.rel (0) target = $region9
    $region8: #{tpu_custom_call.1} parent=1 // pred_region
      %s26 = ssub.s32 512, 512
      %27 = vsyncadd [#allocation6], %s26
      %s28 = sshll.u32 [#allocation5], 4
      %s29 = int_to_ptr.vmem [resolvable:$true] %s28
      %34 = dma.hbm_to_vmem [thread:$0]  %s1, 512, %s29, [#allocation6], 128, 128, 8
    $region9: #{tpu_custom_call.1} parent=1 // pred_fallthru
      _
    // Predicated region
    $region10: #{tpu_custom_call.1} parent=1 // pred_check
      _
    $region11: #{tpu_custom_call.1} parent=1 // pred_check_branch
      %36 = sbr.rel (0) target = $region13
    $region12: #{tpu_custom_call.1} parent=1 // pred_region
      _
    $region13: #{tpu_custom_call.1} parent=1 // pred_fallthru
      _
    // Predicated region
    $region14: #{tpu_custom_call.1} parent=1 // pred_check
      _
    $region15: #{tpu_custom_call.1} parent=1 // pred_check_branch
      %38 = sbr.rel (0) target = $region17
    $region16: #{tpu_custom_call.1} parent=1 // pred_region
      %39 = dma.done [#allocation3], 512
    $region17: #{tpu_custom_call.1} parent=1 // pred_fallthru
      _
    // Predicated region
    $region18: #{tpu_custom_call.1} parent=1 // pred_check
      _
    $region19: #{tpu_custom_call.1} parent=1 // pred_check_branch
      %41 = sbr.rel (0) target = $region21
    $region20: #{tpu_custom_call.1} parent=1 // pred_region
      %42 = dma.done [#allocation6], 512
    $region21: #{tpu_custom_call.1} parent=1 // pred_fallthru
      _
    %v43 = vld [vmem:[#allocation2] sm:$0xff]
    %v44 = vld [vmem:[#allocation2 + $0x8] sm:$0xff]
    %v45 = vld [vmem:[#allocation2 + $0x10] sm:$0xff]
    %v46 = vld [vmem:[#allocation2 + $0x18] sm:$0xff]
    %v47 = vld [vmem:[#allocation5] sm:$0xff]
    %v48 = vld [vmem:[#allocation5 + $0x8] sm:$0xff]
    %v49 = vld [vmem:[#allocation5 + $0x10] sm:$0xff]
    %v50 = vld [vmem:[#allocation5 + $0x18] sm:$0xff]
    %v51 = vld [vmem:[%s2] sm:$0x1]
    %v53 = vlaneseq
    %v54 = vshrl.u32 %v53, 7
    %v55 = vsub.s32 0, %v54
    %v56 = vrot.slane %v51, %v55
    %vm58 = vcmask 261120
    %v60 = vsel %vm58, %v43, 0
    %v63 = vsel %vm58, %v44, 0
    %v66 = vsel %vm58, %v45, 0
    %v69 = vsel %vm58, %v46, 0
    %71 = vmatprep.subr.mxu0 0.0
    %72 = vmatpush1.msra.mxu0 0.0
    %73 = vmatprep.subr.mxu0 0.0
    %74 = vmatpush1.msra.mxu0 0.0
    %75 = vmatprep.subr.mxu0 0.0
    %76 = vmatpush1.msra.mxu0 0.0
    %77 = vmatprep.subr.mxu0 0.0
    %78 = vmatpush1.msra.mxu0 0.0
    %79 = vmatprep.subr.mxu0 0.0
    %80 = vmatpush1.msra.mxu0 0.0
    %81 = vmatprep.subr.mxu0 0.0
    %82 = vmatpush1.msra.mxu0 0.0
    %83 = vmatprep.subr.mxu0 0.0
    %84 = vmatpush1.msra.mxu0 0.0
    %85 = vmatprep.subr.mxu0 0.0
    %86 = vmatpush1.msra.mxu0 0.0
    %87 = vmatprep.subr.mxu0 0.0
    %88 = vmatpush1.msra.mxu0 0.0
    %89 = vmatprep.subr.mxu0 0.0
    %90 = vmatpush1.msra.mxu0 0.0
    %91 = vmatprep.subr.mxu0 0.0
    %92 = vmatpush1.msra.mxu0 0.0
    %93 = vmatprep.subr.mxu0 0.0
    %94 = vmatpush1.msra.mxu0 0.0
    %95 = vmatprep.subr.mxu0 0.0
    %96 = vmatpush1.msra.mxu0 %v50
    %97 = vmatprep.subr.mxu0 0.0
    %98 = vmatpush1.msra.mxu0 %v49
    %99 = vmatprep.subr.mxu0 0.0
    %100 = vmatpush1.msra.mxu0 %v48
    %101 = vmatprep.subr.mxu0 0.0
    %102 = vmatpush1.msra.mxu0 %v47
    %103 = vmatprep.subr.mxu0 0.0
    %104 = vmatpush2.msra.mxu0 0.0
    %105 = vmatprep.subr.mxu0 0.0
    %106 = vmatpush2.msra.mxu0 0.0
    %107 = vmatprep.subr.mxu0 0.0
    %108 = vmatpush2.msra.mxu0 0.0
    %109 = vmatprep.subr.mxu0 0.0
    %110 = vmatpush2.msra.mxu0 0.0
    %111 = vmatprep.subr.mxu0 0.0
    %112 = vmatpush2.msra.mxu0 0.0
    %113 = vmatprep.subr.mxu0 0.0
    %114 = vmatpush2.msra.mxu0 0.0
    %115 = vmatprep.subr.mxu0 0.0
    %116 = vmatpush2.msra.mxu0 0.0
    %117 = vmatprep.subr.mxu0 0.0
    %118 = vmatpush2.msra.mxu0 0.0
    %119 = vmatprep.subr.mxu0 0.0
    %120 = vmatpush2.msra.mxu0 0.0
    %121 = vmatprep.subr.mxu0 0.0
    %122 = vmatpush2.msra.mxu0 0.0
    %123 = vmatprep.subr.mxu0 0.0
    %124 = vmatpush2.msra.mxu0 0.0
    %125 = vmatprep.subr.mxu0 0.0
    %126 = vmatpush2.msra.mxu0 0.0
    %127 = vmatprep.subr.mxu0 0.0
    %128 = vmatpush2.msra.mxu0 0.0
    %129 = vmatprep.subr.mxu0 0.0
    %130 = vmatpush2.msra.mxu0 0.0
    %131 = vmatprep.subr.mxu0 0.0
    %132 = vmatpush2.msra.mxu0 0.0
    %133 = vmatprep.subr.mxu0 0.0
    %134 = vmatpush2.msra.mxu0 0.0
    %135 = vmatprep.mubr.f32.mxu0 0.0
    %136 = vmatmul.mubr.f32.gmra.mxu0 %v60
    %v137 = vpop.f32.mrf.mxu0
    %v138 = vadd.f32 %v56, %v137
    %v139 = vpop.f32.mrf.mxu0
    %140 = vmatprep.mubr.f32.mxu0 0.0
    %141 = vmatmul.mubr.f32.gmra.mxu0 %v63
    %v142 = vpop.f32.mrf.mxu0
    %v143 = vadd.f32 %v56, %v142
    %v144 = vpop.f32.mrf.mxu0
    %145 = vmatprep.mubr.f32.mxu0 0.0
    %146 = vmatmul.mubr.f32.gmra.mxu0 %v66
    %v147 = vpop.f32.mrf.mxu0
    %v148 = vadd.f32 %v56, %v147
    %v149 = vpop.f32.mrf.mxu0
    %150 = vmatprep.mubr.f32.mxu0 0.0
    %151 = vmatmul.mubr.f32.gmra.mxu0 %v69
    %v152 = vpop.f32.mrf.mxu0
    %v153 = vadd.f32 %v56, %v152
    %v154 = vpop.f32.mrf.mxu0
    %155 = vdwg.mxu0
    %vm156 = vcmask 785408
    %157 = vst.msk [vmem:[#allocation7] sm:$0xff] %vm156, %v138
    %158 = vst.msk [vmem:[#allocation7 + $0x8] sm:$0xff] %vm156, %v143
    %159 = vst.msk [vmem:[#allocation7 + $0x10] sm:$0xff] %vm156, %v148
    %160 = vst.msk [vmem:[#allocation7 + $0x18] sm:$0xff] %vm156, %v153
    // Predicated region
    $region22: #{tpu_custom_call.1} parent=1 // pred_check
      _
    $region23: #{tpu_custom_call.1} parent=1 // pred_check_branch
      %162 = sbr.rel (0) target = $region25
    $region24: #{tpu_custom_call.1} parent=1 // pred_region
      %s164 = ssub.s32 512, 512
      %165 = vsyncadd [#allocation4], %s164
      %s166 = sshll.u32 [#allocation7], 4
      %s167 = int_to_ptr.vmem [resolvable:$true] %s166
      %172 = dma.vmem_to_hbm [thread:$0]  %s167, 512, %s3, [#allocation4], 128, 128, 8
    $region25: #{tpu_custom_call.1} parent=1 // pred_fallthru
      _
    // Predicated region
    $region26: #{tpu_custom_call.1} parent=1 // pred_check
      _
    $region27: #{tpu_custom_call.1} parent=1 // pred_check_branch
      %174 = sbr.rel (0) target = $region29
    $region28: #{tpu_custom_call.1} parent=1 // pred_region
      %175 = dma.done [#allocation4], 512
    $region29: #{tpu_custom_call.1} parent=1 // pred_fallthru
      _
    %176 = vsyncpa [#allocation3], 1
    %177 = vsyncpa [#allocation6], 1
    %178 = vsyncpa [#allocation4], 1

</llo_original>
